<compile_context>
chip_gen: v5e
topology: v5e:2x2
jax: 0.10.0
libtpu: 0.0.40
codegen_flags: <defaults>
</compile_context>

<pallas_src>
import functools

import jax
import jax.numpy as jnp
from jax import lax
from jax.experimental import pallas as pl
from jax.experimental.pallas import tpu as pltpu


# --------------------------- parameter preparation ---------------------------

def stack_gate_params(input_size, gate_params):
    """Stacks per-gate Linear params (acting on cat([x, h])) for the kernels.

    gate_params: ((w_i, b_i), (w_f, b_f), (w_g, b_g), (w_o, b_o)) with
      w_*: (input_size + hidden_size, hidden_size), b_*: (hidden_size,).
    Returns (wx (F_in, 4H), wh (H, 4H), bias (4H,)) with kernel gate order
    [i | f | o | g] (contiguous sigmoid gates, trailing tanh gate).
    """
    (wi, bi), (wf, bf_), (wg, bg), (wo, bo) = gate_params
    w = jnp.concatenate([wi, wf, wo, wg], axis=-1)
    b = jnp.concatenate([bi, bf_, bo, bg], axis=-1)
    return w[:input_size], w[input_size:], b


def initialize_state(batch_size, hidden_size, dtype=jnp.float32):
    # Mirrors LSTMCellBase.initialize_state.
    return (jnp.zeros((batch_size, hidden_size), dtype=dtype),
            jnp.zeros((batch_size, hidden_size), dtype=dtype))


def _nbytes(shape, dtype):
    n = 1
    for d in shape:
        n *= int(d)
    return n * jnp.dtype(dtype).itemsize


def _default_batch_tile(B):
    # Prefer >= 2 batch tiles (engages both TensorCores on v7x via the
    # "parallel" axis) as long as each tile still feeds >= 128 MXU rows;
    # otherwise use the largest sublane-aligned divisor of B (big MXU M dim).
    half = B // 2
    if half >= 128 and half % 8 == 0 and B % half == 0:
        return half
    for tb in range(min(B, 256), 0, -8):
        if tb > 0 and B % tb == 0 and tb % 8 == 0:
            return tb
    return B


def _default_time_chunk(T):
    for tt in (8, 4, 2):
        if T % tt == 0:
            return tt
    return 1


# ----------------------------- single time step -----------------------------

def _lstm_cell_kernel(x_ref, h_ref, c_ref, wx_ref, wh_ref, b_ref,
                      h_out_ref, c_out_ref, *, hidden_size):
    H = hidden_size

    # Fused gate matmuls on the MXU, accumulating in f32.  Activations are
    # cast to the weight dtype (bf16 weights => MXU-native bf16 path).
    gates = jnp.dot(x_ref[...].astype(wx_ref.dtype), wx_ref[...],
                    preferred_element_type=jnp.float32)
    gates = gates + jnp.dot(h_ref[...].astype(wh_ref.dtype), wh_ref[...],
                            preferred_element_type=jnp.float32)
    gates = gates + b_ref[...].astype(jnp.float32)          # (1, 4H) broadcasts

    # Gate order [i | f | o | g]: one contiguous sigmoid region + one tanh.
    ifo = jax.nn.sigmoid(gates[:, 0 * H:3 * H])
    g = jnp.tanh(gates[:, 3 * H:4 * H])
    i = ifo[:, 0 * H:1 * H]
    f = ifo[:, 1 * H:2 * H]
    o = ifo[:, 2 * H:3 * H]

    c = c_ref[...].astype(jnp.float32)                       # state math in f32
    c_new = f * c + i * g
    h_new = o * jnp.tanh(c_new)

    h_out_ref[...] = h_new.astype(h_out_ref.dtype)
    c_out_ref[...] = c_new.astype(c_out_ref.dtype)


def lstm_cell_forward(x, hc, wx, wh, bias, *, hidden_size):
    """One LSTMCellBase.forward step.

    x: (B, F_in); hc = (h, c), each (B, H); wx: (F_in, 4H); wh: (H, 4H);
    bias: (4H,), gate order [i|f|o|g] (see stack_gate_params).
    Returns (h_new, c_new); h_new has h.dtype, c_new keeps c.dtype (pass an
    f32 c to avoid bf16 round-trip drift of the cell state across steps).
    """
    h, c = hc
    B = x.shape[0]
    H = hidden_size
    b2d = bias.reshape(1, 4 * H)

    need = (_nbytes(x.shape, x.dtype) + _nbytes(h.shape, h.dtype)
            + _nbytes(c.shape, c.dtype) + _nbytes(wx.shape, wx.dtype)
            + _nbytes(wh.shape, wh.dtype) + _nbytes(b2d.shape, b2d.dtype)
            + _nbytes((B, H), h.dtype) + _nbytes((B, H), c.dtype)
            + _nbytes((B, 4 * H), jnp.float32))
    vmem_limit = int(min(100 * 1024 * 1024, 2 * need + (16 << 20)))
    # TODO(synk): at production H (~1024) add a grid over the 4H axis instead
    # of pulling the full weights into VMEM ungridded.

    vmem = pl.BlockSpec(memory_space=pltpu.MemorySpace.VMEM)
    h_new, c_new = pl.pallas_call(
        functools.partial(_lstm_cell_kernel, hidden_size=H),
        out_shape=(jax.ShapeDtypeStruct((B, H), h.dtype),
                   jax.ShapeDtypeStruct((B, H), c.dtype)),
        in_specs=[vmem] * 6,
        out_specs=(vmem, vmem),
        compiler_params=pltpu.CompilerParams(vmem_limit_bytes=vmem_limit),
    )(x, h, c, wx, wh, b2d)
    return h_new, c_new


# ------------------------- full sequence (time loop) -------------------------

def _lstm_seq_kernel(gx_ref, h0_ref, c0_ref, wh_ref, h_seq_ref, hc_out_ref,
                     hc_acc, *, hidden_size, time_chunk):
    H = hidden_size
    t = pl.program_id(1)

    # Load the initial state into the f32 VMEM carry at the first time chunk
    # of every batch tile.
    @pl.when(t == 0)
    def _():
        hc_acc[:, 0 * H:1 * H] = h0_ref[...].astype(jnp.float32)
        hc_acc[:, 1 * H:2 * H] = c0_ref[...].astype(jnp.float32)

    wh = wh_ref[...]                      # VMEM-resident recurrent weight

    def step(s, carry):
        h, c = carry
        # Only the serial recurrent projection is inside the time loop; the
        # x-projection (+ bias) was precomputed and arrives via gx_ref.
        gates = gx_ref[s].astype(jnp.float32) + jnp.dot(
            h.astype(wh.dtype), wh, preferred_element_type=jnp.float32)
        ifo = jax.nn.sigmoid(gates[:, 0 * H:3 * H])     # [i|f|o] contiguous
        g = jnp.tanh(gates[:, 3 * H:4 * H])
        i = ifo[:, 0 * H:1 * H]
        f = ifo[:, 1 * H:2 * H]
        o = ifo[:, 2 * H:3 * H]
        c_new = f * c + i * g                           # state math in f32
        h_new = o * jnp.tanh(c_new)
        h_seq_ref[s] = h_new.astype(h_seq_ref.dtype)    # lane-dense store
        return h_new, c_new

    carry0 = (hc_acc[:, 0 * H:1 * H], hc_acc[:, 1 * H:2 * H])
    h_fin, c_fin = lax.fori_loop(0, time_chunk, step, carry0, unroll=True)

    # Carry state to the next time chunk in f32 VMEM scratch.
    hc_acc[:, 0 * H:1 * H] = h_fin
    hc_acc[:, 1 * H:2 * H] = c_fin

    # Final [h | c] slab written only on the last chunk (resident out block).
    @pl.when(t == pl.num_programs(1) - 1)
    def _():
        hc_out_ref[...] = hc_acc[...].astype(hc_out_ref.dtype)


def lstm_sequence_forward(xs, hc0, wx, wh, bias, *, hidden_size,
                          batch_tile=None, time_chunk=None):
    """Runs the LSTM cell over a sequence xs: (T, B, F_in).

    The input projection is hoisted out of the recurrence (one big XLA matmul,
    f32 accumulation); W_h stays VMEM-resident across all steps; h/c are
    carried in f32 VMEM scratch; the time axis is chunked so each grid step
    runs `time_chunk` unrolled cell updates.  Returns (h_seq (T,B,H),
    (h_T, c_T)).
    """
    T, B, F_in = xs.shape
    H = hidden_size
    h0, c0 = hc0

    TB = _default_batch_tile(B) if batch_tile is None else batch_tile
    TT = _default_time_chunk(T) if time_chunk is None else time_chunk
    assert B % TB == 0, "batch_tile must divide B"
    assert T % TT == 0, "time_chunk must divide T"
    assert TB % 8 == 0 or TB == B, "batch_tile should be sublane-aligned (x8)"
    nb, nt = B // TB, T // TT

    # Hoist the input projection (+ bias) out of the recurrence: one
    # MXU-efficient (T*B, F_in) x (F_in, 4H) matmul (XLA), f32 accumulation.
    # gx is kept in f32 for accuracy of the precomputed partial sums.
    gx = (jnp.einsum("tbf,fg->tbg", xs, wx,
                     preferred_element_type=jnp.float32)
          + bias.astype(jnp.float32))

    f32b = jnp.dtype(jnp.float32).itemsize
    out_b = jnp.dtype(h0.dtype).itemsize
    need = (2 * TT * TB * 4 * H * f32b                       # gx blocks (2-buf)
            + 2 * H * 4 * H * jnp.dtype(wh.dtype).itemsize   # resident W_h
            + 2 * 2 * TB * H * jnp.dtype(h0.dtype).itemsize  # h0 / c0 blocks
            + 2 * TT * TB * H * out_b                        # h_seq blocks
            + 2 * TB * 2 * H * out_b                         # final [h|c]
            + TB * 2 * H * f32b)                             # carry scratch
    vmem_limit = int(min(100 * 1024 * 1024, 2 * need + (16 << 20)))

    h_seq, hc_last = pl.pallas_call(
        functools.partial(_lstm_seq_kernel, hidden_size=H, time_chunk=TT),
        out_shape=(
            jax.ShapeDtypeStruct((T, B, H), h0.dtype),
            jax.ShapeDtypeStruct((B, 2 * H), h0.dtype),
        ),
        grid_spec=pltpu.PrefetchScalarGridSpec(
            num_scalar_prefetch=0,
            grid=(nb, nt),
            in_specs=[
                # Precomputed gate inputs, streamed one (TT, TB, 4H) chunk.
                pl.BlockSpec((TT, TB, 4 * H), lambda b, t: (t, b, 0)),
                pl.BlockSpec((TB, H), lambda b, t: (b, 0)),        # h0
                pl.BlockSpec((TB, H), lambda b, t: (b, 0)),        # c0
                # Resident recurrent weight.  TODO(synk): v7x @ H~1024: add
                # pipeline_mode=pl.Buffered(1) / tile 4H / fp8 weights to fit
                # 64 MiB physical VMEM.
                pl.BlockSpec((H, 4 * H), lambda b, t: (0, 0)),
            ],
            out_specs=(
                pl.BlockSpec((TT, TB, H), lambda b, t: (t, b, 0)),   # h_t chunk
                pl.BlockSpec((TB, 2 * H), lambda b, t: (b, 0)),      # final [h|c]
            ),
            scratch_shapes=[pltpu.VMEM((TB, 2 * H), jnp.float32)],   # carry
        ),
        compiler_params=pltpu.CompilerParams(
            dimension_semantics=("parallel", "arbitrary"),
            vmem_limit_bytes=vmem_limit,
        ),
    )(gx, h0, c0, wh)
    return h_seq, (hc_last[:, :H], hc_last[:, H:])


# ------------------------------ pure-JAX reference ---------------------------

def _reference_cell(x, h, c, gate_params):
    # Literal LSTMCellBase.forward semantics with per-gate Linear modules.
    (wi, bi), (wf, bf_), (wg, bg), (wo, bo) = gate_params
    xh = jnp.concatenate([x, h], axis=-1)
    i = jax.nn.sigmoid(xh @ wi + bi)
    f = jax.nn.sigmoid(xh @ wf + bf_)
    g = jnp.tanh(xh @ wg + bg)
    o = jax.nn.sigmoid(xh @ wo + bo)
    c_new = f * c + i * g
    h_new = o * jnp.tanh(c_new)
    return h_new, c_new


if __name__ == "__main__":
    B, F_IN, H, T = 16, 64, 128, 16     # H multiple of 128 -> lane-dense gates
    dtype = jnp.float32

    key = jax.random.PRNGKey(0)
    keys = jax.random.split(key, 12)
    kx, kh, kc, ks = keys[0], keys[1], keys[2], keys[3]

    x = jax.random.normal(kx, (B, F_IN), dtype=dtype)
    h = jax.random.normal(kh, (B, H), dtype=dtype)
    c = jax.random.normal(kc, (B, H), dtype=dtype)
    xs = jax.random.normal(ks, (T, B, F_IN), dtype=dtype)

    # Per-gate nn.Linear(F_in + H, H)-style parameters (i, f, g, o).
    fan_in = F_IN + H
    bound = 1.0 / float(fan_in) ** 0.5
    gate_params = []
    for gi in range(4):
        wkey, bkey = keys[4 + 2 * gi], keys[5 + 2 * gi]
        w = jax.random.uniform(wkey, (fan_in, H), dtype=dtype,
                               minval=-bound, maxval=bound)
        b = jax.random.uniform(bkey, (H,), dtype=dtype,
                               minval=-bound, maxval=bound)
        gate_params.append((w, b))
    gate_params = tuple(gate_params)

    # Stack once on the host: split [x|h] rows, gate order [i|f|o|g].
    wx, wh, bias = stack_gate_params(F_IN, gate_params)

    # --- single step ----------------------------------------------------------
    h_new, c_new = jax.block_until_ready(
        lstm_cell_forward(x, (h, c), wx, wh, bias, hidden_size=H))
    h_ref, c_ref = _reference_cell(x, h, c, gate_params)
    assert jnp.allclose(h_new, h_ref, atol=1e-4, rtol=1e-4)
    assert jnp.allclose(c_new, c_ref, atol=1e-4, rtol=1e-4)

    # --- sequence: hoisted x-projection + time-chunked in-kernel recurrence --
    h0, c0 = initialize_state(B, H, dtype)
    h_seq, (h_T, c_T) = jax.block_until_ready(
        lstm_sequence_forward(xs, (h0, c0), wx, wh, bias, hidden_size=H))

    hh, cc = h0, c0
    h_ref_seq = []
    for t in range(T):
        hh, cc = _reference_cell(xs[t], hh, cc, gate_params)
        h_ref_seq.append(hh)
    h_ref_seq = jnp.stack(h_ref_seq)
    assert jnp.allclose(h_seq, h_ref_seq, atol=1e-3, rtol=1e-3)
    assert jnp.allclose(h_T, hh, atol=1e-3, rtol=1e-3)
    assert jnp.allclose(c_T, cc, atol=1e-3, rtol=1e-3)

    # Explicit tiling: 2 batch tiles + 4 time chunks exercises the per-tile
    # state re-init and the cross-chunk f32 carry.
    h_seq2, (h_T2, c_T2) = jax.block_until_ready(
        lstm_sequence_forward(xs, (h0, c0), wx, wh, bias, hidden_size=H,
                              batch_tile=8, time_chunk=4))
    assert jnp.allclose(h_seq2, h_ref_seq, atol=1e-3, rtol=1e-3)
    assert jnp.allclose(h_T2, hh, atol=1e-3, rtol=1e-3)
    assert jnp.allclose(c_T2, cc, atol=1e-3, rtol=1e-3)

    # Recommended bf16 path: bf16 weights/activations, f32 accumulation and
    # f32 state carry inside the kernel (looser check against f32 reference).
    bf16 = jnp.bfloat16
    h_seq_bf, (h_T_bf, c_T_bf) = jax.block_until_ready(
        lstm_sequence_forward(xs.astype(bf16),
                              (h0.astype(bf16), c0.astype(bf16)),
                              wx.astype(bf16), wh.astype(bf16),
                              bias.astype(bf16), hidden_size=H))
    err = jnp.max(jnp.abs(h_seq_bf.astype(jnp.float32) - h_ref_seq))
    assert bool(jnp.isfinite(err)) and float(err) < 0.2

    print("KERNEL_OK")
</pallas_src>

<mosaic_0001>
module attributes {stable_mosaic.version = 11 : i64} {
  func.func @_lstm_cell_kernel(%arg0: memref<16x64xf32, #tpu.memory_space<vmem>>, %arg1: memref<16x128xf32, #tpu.memory_space<vmem>>, %arg2: memref<16x128xf32, #tpu.memory_space<vmem>>, %arg3: memref<64x512xf32, #tpu.memory_space<vmem>>, %arg4: memref<128x512xf32, #tpu.memory_space<vmem>>, %arg5: memref<1x512xf32, #tpu.memory_space<vmem>>, %arg6: memref<16x128xf32, #tpu.memory_space<vmem>>, %arg7: memref<16x128xf32, #tpu.memory_space<vmem>>) attributes {dimension_semantics = [], scalar_prefetch = 0 : i64, scratch_operands = 0 : i64, tpu.core_type = #tpu.core_type<tc>} {
    %c0 = arith.constant 0 : index
    %c0_0 = arith.constant 0 : index
    %0 = vector.load %arg0[%c0, %c0_0] : memref<16x64xf32, #tpu.memory_space<vmem>>, vector<16x64xf32>
    %c0_1 = arith.constant 0 : index
    %c0_2 = arith.constant 0 : index
    %1 = vector.load %arg3[%c0_1, %c0_2] : memref<64x512xf32, #tpu.memory_space<vmem>>, vector<64x512xf32>
    %cst = arith.constant dense<0.000000e+00> : vector<16x512xf32>
    %2 = tpu.matmul %0, %1, %cst {dimension_numbers = #tpu.dot_dimension_numbers<[1], [0], [0], [1], [0, 0, 1, 1], [], []>} : vector<16x64xf32>, vector<64x512xf32>, vector<16x512xf32> -> vector<16x512xf32>
    %c0_3 = arith.constant 0 : index
    %c0_4 = arith.constant 0 : index
    %3 = vector.load %arg1[%c0_3, %c0_4] : memref<16x128xf32, #tpu.memory_space<vmem>>, vector<16x128xf32>
    %c0_5 = arith.constant 0 : index
    %c0_6 = arith.constant 0 : index
    %4 = vector.load %arg4[%c0_5, %c0_6] : memref<128x512xf32, #tpu.memory_space<vmem>>, vector<128x512xf32>
    %cst_7 = arith.constant dense<0.000000e+00> : vector<16x512xf32>
    %5 = tpu.matmul %3, %4, %cst_7 {dimension_numbers = #tpu.dot_dimension_numbers<[1], [0], [0], [1], [0, 0, 1, 1], [], []>} : vector<16x128xf32>, vector<128x512xf32>, vector<16x512xf32> -> vector<16x512xf32>
    %6 = arith.addf %2, %5 : vector<16x512xf32>
    %c0_8 = arith.constant 0 : index
    %c0_9 = arith.constant 0 : index
    %7 = vector.load %arg5[%c0_8, %c0_9] : memref<1x512xf32, #tpu.memory_space<vmem>>, vector<1x512xf32>
    %8 = vector.broadcast %7 : vector<1x512xf32> to vector<16x512xf32>
    %9 = arith.addf %6, %8 : vector<16x512xf32>
    %10 = vector.extract_strided_slice %9 {offsets = [0, 0], sizes = [16, 384], strides = [1, 1]} : vector<16x512xf32> to vector<16x384xf32>
    %11 = arith.negf %10 : vector<16x384xf32>
    %12 = math.exp %11 : vector<16x384xf32>
    %cst_10 = arith.constant 1.000000e+00 : f32
    %13 = vector.broadcast %cst_10 : f32 to vector<16x384xf32>
    %14 = arith.addf %13, %12 : vector<16x384xf32>
    %15 = arith.divf %13, %14 : vector<16x384xf32>
    %16 = vector.extract_strided_slice %9 {offsets = [0, 384], sizes = [16, 128], strides = [1, 1]} : vector<16x512xf32> to vector<16x128xf32>
    %17 = math.tanh %16 : vector<16x128xf32>
    %18 = vector.extract_strided_slice %15 {offsets = [0, 0], sizes = [16, 128], strides = [1, 1]} : vector<16x384xf32> to vector<16x128xf32>
    %19 = vector.extract_strided_slice %15 {offsets = [0, 128], sizes = [16, 128], strides = [1, 1]} : vector<16x384xf32> to vector<16x128xf32>
    %20 = vector.extract_strided_slice %15 {offsets = [0, 256], sizes = [16, 128], strides = [1, 1]} : vector<16x384xf32> to vector<16x128xf32>
    %c0_11 = arith.constant 0 : index
    %c0_12 = arith.constant 0 : index
    %21 = vector.load %arg2[%c0_11, %c0_12] : memref<16x128xf32, #tpu.memory_space<vmem>>, vector<16x128xf32>
    %22 = arith.mulf %19, %21 : vector<16x128xf32>
    %23 = arith.mulf %18, %17 : vector<16x128xf32>
    %24 = arith.addf %22, %23 : vector<16x128xf32>
    %25 = math.tanh %24 : vector<16x128xf32>
    %26 = arith.mulf %20, %25 : vector<16x128xf32>
    %c0_13 = arith.constant 0 : index
    %c0_14 = arith.constant 0 : index
    %27 = vector.load %arg6[%c0_13, %c0_14] : memref<16x128xf32, #tpu.memory_space<vmem>>, vector<16x128xf32>
    tpu.vector_store %arg6[%c0_13, %c0_14], %26 {strides = array<i32>} : memref<16x128xf32, #tpu.memory_space<vmem>>, vector<16x128xf32>,
    %c0_15 = arith.constant 0 : index
    %c0_16 = arith.constant 0 : index
    %28 = vector.load %arg7[%c0_15, %c0_16] : memref<16x128xf32, #tpu.memory_space<vmem>>, vector<16x128xf32>
    tpu.vector_store %arg7[%c0_15, %c0_16], %24 {strides = array<i32>} : memref<16x128xf32, #tpu.memory_space<vmem>>, vector<16x128xf32>,
    return
  }
}

</mosaic_0001>

<llo_original>
// kernel: tpu_custom_call.1
$region0: #{tpu_custom_call.1}
  #allocation0 [shape = 'u32[]', space=smem, size = 0x4, offset = 0x4, fixed_abs, tag = 'smem constant byte address 0x4 - core index']
  #allocation1 [shape = 'u32[72,128]{1,0:T(1,128)}', space=vmem, size = 0x9000, scoped, tag = 'internal scratch']
  %s0 = inlined_call_operand.hbm [shape: f32[16,64], index: 0, kind: input, shape index: {}]
  %s1 = inlined_call_operand.hbm [shape: f32[16,128], index: 1, kind: input, shape index: {}]
  %s2 = inlined_call_operand.hbm [shape: f32[16,128], index: 2, kind: input, shape index: {}]
  %s3 = inlined_call_operand.hbm [shape: f32[64,512], index: 3, kind: input, shape index: {}]
  %s4 = inlined_call_operand.hbm [shape: f32[128,512], index: 4, kind: input, shape index: {}]
  %s5 = inlined_call_operand.vmem [shape: f32[1,512], index: 5, kind: input, shape index: {}]
  %s6 = inlined_call_operand.hbm [shape: f32[16,128], index: 6, kind: output, shape index: {0}]
  %s7 = inlined_call_operand.hbm [shape: f32[16,128], index: 7, kind: output, shape index: {1}]
  %8 = xla_tuple %s6, %s7
  %s9 = sld [smem:[#allocation0]]
  $region62: #{tpu_custom_call.1} parent=0
    _
  %s11 = ssub.s32 1, %s9
  %s12 = scalar_select 0, %s11, %s9
  $region1: #{tpu_custom_call.1} parent=0
    #allocation2 [shape = 'u8[8192]{0}', space=vmem, size = 0x2000, scoped, tag = 'input window, operand 0, single buffered']
    #allocation3 [shape = 's32[1]{0}', space=sflag, size = 0x4, scoped, tag = 'scoped memory for tpu_custom_call.1']
    #allocation4 [shape = 's32[1]{0}', space=sflag, size = 0x4, scoped, tag = 'scoped memory for tpu_custom_call.1']
    #allocation5 [shape = 'u8[8192]{0}', space=vmem, size = 0x2000, scoped, tag = 'input window, operand 1, single buffered']
    #allocation6 [shape = 's32[1]{0}', space=sflag, size = 0x4, scoped, tag = 'scoped memory for tpu_custom_call.1']
    #allocation7 [shape = 'u8[8192]{0}', space=vmem, size = 0x2000, scoped, tag = 'input window, operand 2, single buffered']
    #allocation8 [shape = 'u8[131072]{0}', space=vmem, size = 0x20000, scoped, tag = 'input window, operand 3, single buffered']
    #allocation9 [shape = 's32[1]{0}', space=sflag, size = 0x4, scoped, tag = 'scoped memory for tpu_custom_call.1']
    #allocation10 [shape = 'u8[262144]{0}', space=vmem, size = 0x40000, scoped, tag = 'input window, operand 4, single buffered']
    #allocation11 [shape = 'u8[8192]{0}', space=vmem, size = 0x2000, scoped, tag = 'output window, operand 0, single buffered']
    #allocation12 [shape = 'u8[8192]{0}', space=vmem, size = 0x2000, scoped, tag = 'output window, operand 1, single buffered']
    #allocation13 [shape = 's32[1]{0}', space=sflag, size = 0x4, scoped, tag = 'scoped memory for tpu_custom_call.1']
    %13 = vsyncpa [#allocation3], 0
    %14 = vsyncpa [#allocation6], 0
    %15 = vsyncpa [#allocation9], 0
    %16 = vsyncpa [#allocation4], 0
    %17 = vsyncpa [#allocation13], 0
    // Predicated region
    $region2: #{tpu_custom_call.1} parent=1 // pred_check
      _
    $region3: #{tpu_custom_call.1} parent=1 // pred_check_branch
      %19 = sbr.rel (0) target = $region5
    $region4: #{tpu_custom_call.1} parent=1 // pred_region
      %21 = vsyncadd [#allocation3], 0
      %s22 = sshll.u32 %s0, 4
      %s23 = int_to_ptr.hbm [resolvable:$true] %s22
      %s24 = sshll.u32 [#allocation2], 4
      %s25 = int_to_ptr.vmem [resolvable:$true] %s24
      %30 = dma.hbm_to_vmem [thread:$0]  %s23, 256, %s25, [#allocation3], 128, 128, 8
    $region5: #{tpu_custom_call.1} parent=1 // pred_fallthru
      _
    // Predicated region
    $region6: #{tpu_custom_call.1} parent=1 // pred_check
      _
    $region7: #{tpu_custom_call.1} parent=1 // pred_check_branch
      %32 = sbr.rel (0) target = $region9
    $region8: #{tpu_custom_call.1} parent=1 // pred_region
      %34 = vsyncadd [#allocation6], 0
      %s35 = sshll.u32 %s1, 4
      %s36 = int_to_ptr.hbm [resolvable:$true] %s35
      %s37 = sshll.u32 [#allocation5], 4
      %s38 = int_to_ptr.vmem [resolvable:$true] %s37
      %43 = dma.hbm_to_vmem [thread:$0]  %s36, 256, %s38, [#allocation6], 128, 128, 8
    $region9: #{tpu_custom_call.1} parent=1 // pred_fallthru
      _
    // Predicated region
    $region10: #{tpu_custom_call.1} parent=1 // pred_check
      _
    $region11: #{tpu_custom_call.1} parent=1 // pred_check_branch
      %45 = sbr.rel (0) target = $region13
    $region12: #{tpu_custom_call.1} parent=1 // pred_region
      %47 = vsyncadd [#allocation6], 0
      %s48 = sshll.u32 %s2, 4
      %s49 = int_to_ptr.hbm [resolvable:$true] %s48
      %s50 = sshll.u32 [#allocation7], 4
      %s51 = int_to_ptr.vmem [resolvable:$true] %s50
      %56 = dma.hbm_to_vmem [thread:$0]  %s49, 256, %s51, [#allocation6], 128, 128, 8
    $region13: #{tpu_custom_call.1} parent=1 // pred_fallthru
      _
    // Predicated region
    $region14: #{tpu_custom_call.1} parent=1 // pred_check
      _
    $region15: #{tpu_custom_call.1} parent=1 // pred_check_branch
      %58 = sbr.rel (0) target = $region17
    $region16: #{tpu_custom_call.1} parent=1 // pred_region
      %60 = vsyncadd [#allocation9], 0
      %s61 = sshll.u32 %s3, 4
      %s62 = int_to_ptr.hbm [resolvable:$true] %s61
      %s63 = sshll.u32 [#allocation8], 4
      %s64 = int_to_ptr.vmem [resolvable:$true] %s63
      %69 = dma.hbm_to_vmem [thread:$0]  %s62, 4096, %s64, [#allocation9], 512, 512, 32
    $region17: #{tpu_custom_call.1} parent=1 // pred_fallthru
      _
    // Predicated region
    $region18: #{tpu_custom_call.1} parent=1 // pred_check
      _
    $region19: #{tpu_custom_call.1} parent=1 // pred_check_branch
      %71 = sbr.rel (0) target = $region21
    $region20: #{tpu_custom_call.1} parent=1 // pred_region
      %73 = vsyncadd [#allocation9], 0
      %s74 = sshll.u32 %s4, 4
      %s75 = int_to_ptr.hbm [resolvable:$true] %s74
      %s76 = sshll.u32 [#allocation10], 4
      %s77 = int_to_ptr.vmem [resolvable:$true] %s76
      %82 = dma.hbm_to_vmem [thread:$0]  %s75, 8192, %s77, [#allocation9], 512, 512, 32
    $region21: #{tpu_custom_call.1} parent=1 // pred_fallthru
      _
    // Predicated region
    $region22: #{tpu_custom_call.1} parent=1 // pred_check
      _
    $region23: #{tpu_custom_call.1} parent=1 // pred_check_branch
      %84 = sbr.rel (0) target = $region25
    $region24: #{tpu_custom_call.1} parent=1 // pred_region
      _
    $region25: #{tpu_custom_call.1} parent=1 // pred_fallthru
      _
    // Predicated region
    $region26: #{tpu_custom_call.1} parent=1 // pred_check
      _
    $region27: #{tpu_custom_call.1} parent=1 // pred_check_branch
      %86 = sbr.rel (0) target = $region29
    $region28: #{tpu_custom_call.1} parent=1 // pred_region
      %88 = dma.done [#allocation3], 256
    $region29: #{tpu_custom_call.1} parent=1 // pred_fallthru
      _
    // Predicated region
    $region30: #{tpu_custom_call.1} parent=1 // pred_check
      _
    $region31: #{tpu_custom_call.1} parent=1 // pred_check_branch
      %90 = sbr.rel (0) target = $region33
    $region32: #{tpu_custom_call.1} parent=1 // pred_region
      %92 = dma.done [#allocation6], 256
    $region33: #{tpu_custom_call.1} parent=1 // pred_fallthru
      _
    // Predicated region
    $region34: #{tpu_custom_call.1} parent=1 // pred_check
      _
    $region35: #{tpu_custom_call.1} parent=1 // pred_check_branch
      %94 = sbr.rel (0) target = $region37
    $region36: #{tpu_custom_call.1} parent=1 // pred_region
      %96 = dma.done [#allocation6], 256
    $region37: #{tpu_custom_call.1} parent=1 // pred_fallthru
      _
    // Predicated region
    $region38: #{tpu_custom_call.1} parent=1 // pred_check
      _
    $region39: #{tpu_custom_call.1} parent=1 // pred_check_branch
      %98 = sbr.rel (0) target = $region41
    $region40: #{tpu_custom_call.1} parent=1 // pred_region
      %100 = dma.done [#allocation9], 4096
    $region41: #{tpu_custom_call.1} parent=1 // pred_fallthru
      _
    // Predicated region
    $region42: #{tpu_custom_call.1} parent=1 // pred_check
      _
    $region43: #{tpu_custom_call.1} parent=1 // pred_check_branch
      %102 = sbr.rel (0) target = $region45
    $region44: #{tpu_custom_call.1} parent=1 // pred_region
      %104 = dma.done [#allocation9], 8192
    $region45: #{tpu_custom_call.1} parent=1 // pred_fallthru
      _
    %v105 = vld [vmem:[#allocation2] sm:$0xff]
    %v106 = vld [vmem:[#allocation2 + $0x8] sm:$0xff]
    %v107 = vld [vmem:[#allocation8] sm:$0xff]
    %v108 = vld [vmem:[#allocation8 + $0x8] sm:$0xff]
    %v109 = vld [vmem:[#allocation8 + $0x10] sm:$0xff]
    %v110 = vld [vmem:[#allocation8 + $0x18] sm:$0xff]
    %v111 = vld [vmem:[#allocation8 + $0x20] sm:$0xff]
    %v112 = vld [vmem:[#allocation8 + $0x28] sm:$0xff]
    %v113 = vld [vmem:[#allocation8 + $0x30] sm:$0xff]
    %v114 = vld [vmem:[#allocation8 + $0x38] sm:$0xff]
    %v115 = vld [vmem:[#allocation8 + $0x40] sm:$0xff]
    %v116 = vld [vmem:[#allocation8 + $0x48] sm:$0xff]
    %v117 = vld [vmem:[#allocation8 + $0x50] sm:$0xff]
    %v118 = vld [vmem:[#allocation8 + $0x58] sm:$0xff]
    %v119 = vld [vmem:[#allocation8 + $0x60] sm:$0xff]
    %v120 = vld [vmem:[#allocation8 + $0x68] sm:$0xff]
    %v121 = vld [vmem:[#allocation8 + $0x70] sm:$0xff]
    %v122 = vld [vmem:[#allocation8 + $0x78] sm:$0xff]
    %v123 = vld [vmem:[#allocation8 + $0x80] sm:$0xff]
    %v124 = vld [vmem:[#allocation8 + $0x88] sm:$0xff]
    %v125 = vld [vmem:[#allocation8 + $0x90] sm:$0xff]
    %v126 = vld [vmem:[#allocation8 + $0x98] sm:$0xff]
    %v127 = vld [vmem:[#allocation8 + $0xa0] sm:$0xff]
    %v128 = vld [vmem:[#allocation8 + $0xa8] sm:$0xff]
    %v129 = vld [vmem:[#allocation8 + $0xb0] sm:$0xff]
    %v130 = vld [vmem:[#allocation8 + $0xb8] sm:$0xff]
    %v131 = vld [vmem:[#allocation8 + $0xc0] sm:$0xff]
    %v132 = vld [vmem:[#allocation8 + $0xc8] sm:$0xff]
    %v133 = vld [vmem:[#allocation8 + $0xd0] sm:$0xff]
    %v134 = vld [vmem:[#allocation8 + $0xd8] sm:$0xff]
    %v135 = vld [vmem:[#allocation8 + $0xe0] sm:$0xff]
    %v136 = vld [vmem:[#allocation8 + $0xe8] sm:$0xff]
    %v137 = vld [vmem:[#allocation8 + $0xf0] sm:$0xff]
    %v138 = vld [vmem:[#allocation8 + $0xf8] sm:$0xff]
    %v139 = vld [vmem:[#allocation5] sm:$0xff]
    %v140 = vld [vmem:[#allocation5 + $0x8] sm:$0xff]
    %v141 = vld [vmem:[#allocation10] sm:$0xff]
    %v142 = vld [vmem:[#allocation10 + $0x8] sm:$0xff]
    %v143 = vld [vmem:[#allocation10 + $0x10] sm:$0xff]
    %v144 = vld [vmem:[#allocation10 + $0x18] sm:$0xff]
    %v145 = vld [vmem:[#allocation10 + $0x20] sm:$0xff]
    %v146 = vld [vmem:[#allocation10 + $0x28] sm:$0xff]
    %v147 = vld [vmem:[#allocation10 + $0x30] sm:$0xff]
    %v148 = vld [vmem:[#allocation10 + $0x38] sm:$0xff]
    %v149 = vld [vmem:[#allocation10 + $0x40] sm:$0xff]
    %v150 = vld [vmem:[#allocation10 + $0x48] sm:$0xff]
    %v151 = vld [vmem:[#allocation10 + $0x50] sm:$0xff]
    %v152 = vld [vmem:[#allocation10 + $0x58] sm:$0xff]
    %v153 = vld [vmem:[#allocation10 + $0x60] sm:$0xff]
    %v154 = vld [vmem:[#allocation10 + $0x68] sm:$0xff]
    %v155 = vld [vmem:[#allocation10 + $0x70] sm:$0xff]
    %v156 = vld [vmem:[#allocation10 + $0x78] sm:$0xff]
    %v157 = vld [vmem:[#allocation10 + $0x80] sm:$0xff]
    %v158 = vld [vmem:[#allocation10 + $0x88] sm:$0xff]
    %v159 = vld [vmem:[#allocation10 + $0x90] sm:$0xff]
    %v160 = vld [vmem:[#allocation10 + $0x98] sm:$0xff]
    %v161 = vld [vmem:[#allocation10 + $0xa0] sm:$0xff]
    %v162 = vld [vmem:[#allocation10 + $0xa8] sm:$0xff]
    %v163 = vld [vmem:[#allocation10 + $0xb0] sm:$0xff]
    %v164 = vld [vmem:[#allocation10 + $0xb8] sm:$0xff]
    %v165 = vld [vmem:[#allocation10 + $0xc0] sm:$0xff]
    %v166 = vld [vmem:[#allocation10 + $0xc8] sm:$0xff]
    %v167 = vld [vmem:[#allocation10 + $0xd0] sm:$0xff]
    %v168 = vld [vmem:[#allocation10 + $0xd8] sm:$0xff]
    %v169 = vld [vmem:[#allocation10 + $0xe0] sm:$0xff]
    %v170 = vld [vmem:[#allocation10 + $0xe8] sm:$0xff]
    %v171 = vld [vmem:[#allocation10 + $0xf0] sm:$0xff]
    %v172 = vld [vmem:[#allocation10 + $0xf8] sm:$0xff]
    %v173 = vld [vmem:[#allocation10 + $0x100] sm:$0xff]
    %v174 = vld [vmem:[#allocation10 + $0x108] sm:$0xff]
    %v175 = vld [vmem:[#allocation10 + $0x110] sm:$0xff]
    %v176 = vld [vmem:[#allocation10 + $0x118] sm:$0xff]
    %v177 = vld [vmem:[#allocation10 + $0x120] sm:$0xff]
    %v178 = vld [vmem:[#allocation10 + $0x128] sm:$0xff]
    %v179 = vld [vmem:[#allocation10 + $0x130] sm:$0xff]
    %v180 = vld [vmem:[#allocation10 + $0x138] sm:$0xff]
    %v181 = vld [vmem:[#allocation10 + $0x140] sm:$0xff]
    %v182 = vld [vmem:[#allocation10 + $0x148] sm:$0xff]
    %v183 = vld [vmem:[#allocation10 + $0x150] sm:$0xff]
    %v184 = vld [vmem:[#allocation10 + $0x158] sm:$0xff]
    %v185 = vld [vmem:[#allocation10 + $0x160] sm:$0xff]
    %v186 = vld [vmem:[#allocation10 + $0x168] sm:$0xff]
    %v187 = vld [vmem:[#allocation10 + $0x170] sm:$0xff]
    %v188 = vld [vmem:[#allocation10 + $0x178] sm:$0xff]
    %v189 = vld [vmem:[#allocation10 + $0x180] sm:$0xff]
    %v190 = vld [vmem:[#allocation10 + $0x188] sm:$0xff]
    %v191 = vld [vmem:[#allocation10 + $0x190] sm:$0xff]
    %v192 = vld [vmem:[#allocation10 + $0x198] sm:$0xff]
    %v193 = vld [vmem:[#allocation10 + $0x1a0] sm:$0xff]
    %v194 = vld [vmem:[#allocation10 + $0x1a8] sm:$0xff]
    %v195 = vld [vmem:[#allocation10 + $0x1b0] sm:$0xff]
    %v196 = vld [vmem:[#allocation10 + $0x1b8] sm:$0xff]
    %v197 = vld [vmem:[#allocation10 + $0x1c0] sm:$0xff]
    %v198 = vld [vmem:[#allocation10 + $0x1c8] sm:$0xff]
    %v199 = vld [vmem:[#allocation10 + $0x1d0] sm:$0xff]
    %v200 = vld [vmem:[#allocation10 + $0x1d8] sm:$0xff]
    %v201 = vld [vmem:[#allocation10 + $0x1e0] sm:$0xff]
    %v202 = vld [vmem:[#allocation10 + $0x1e8] sm:$0xff]
    %v203 = vld [vmem:[#allocation10 + $0x1f0] sm:$0xff]
    %v204 = vld [vmem:[#allocation10 + $0x1f8] sm:$0xff]
    %205 = vmatpush.msra.mxu0 %v201
    %206 = vmatpush.msra.mxu0 %v197
    %207 = vmatpush.msra.mxu0 %v193
    %208 = vmatpush.msra.mxu0 %v189
    %209 = vmatpush.msra.mxu0 %v185
    %210 = vmatpush.msra.mxu0 %v181
    %211 = vmatpush.msra.mxu0 %v177
    %212 = vmatpush.msra.mxu0 %v173
    %213 = vmatpush.msra.mxu0 %v169
    %214 = vmatpush.msra.mxu0 %v165
    %215 = vmatpush.msra.mxu0 %v161
    %216 = vmatpush.msra.mxu0 %v157
    %217 = vmatpush.msra.mxu0 %v153
    %218 = vmatpush.msra.mxu0 %v149
    %219 = vmatpush.msra.mxu0 %v145
    %220 = vmatpush.msra.mxu0 %v141
    %221 = vmatmul.f32.gmra.mxu0 %v139
    %v222 = vpop.f32.mrf.mxu0
    %v223 = vadd.f32 0.0, %v222
    %224 = vmatmul.f32.gmra.mxu0 %v140
    %v225 = vpop.f32.mrf.mxu0
    %v226 = vadd.f32 0.0, %v225
    %227 = vdwg.mxu0
    %228 = vmatpush.msra.mxu0 %v202
    %229 = vmatpush.msra.mxu0 %v198
    %230 = vmatpush.msra.mxu0 %v194
    %231 = vmatpush.msra.mxu0 %v190
    %232 = vmatpush.msra.mxu0 %v186
    %233 = vmatpush.msra.mxu0 %v182
    %234 = vmatpush.msra.mxu0 %v178
    %235 = vmatpush.msra.mxu0 %v174
    %236 = vmatpush.msra.mxu0 %v170
    %237 = vmatpush.msra.mxu0 %v166
    %238 = vmatpush.msra.mxu0 %v162
    %239 = vmatpush.msra.mxu0 %v158
    %240 = vmatpush.msra.mxu0 %v154
    %241 = vmatpush.msra.mxu0 %v150
    %242 = vmatpush.msra.mxu0 %v146
    %243 = vmatpush.msra.mxu0 %v142
    %244 = vmatmul.f32.gmra.mxu0 %v139
    %v245 = vpop.f32.mrf.mxu0
    %v246 = vadd.f32 0.0, %v245
    %247 = vmatmul.f32.gmra.mxu0 %v140
    %v248 = vpop.f32.mrf.mxu0
    %v249 = vadd.f32 0.0, %v248
    %250 = vdwg.mxu0
    %251 = vmatpush.msra.mxu0 %v203
    %252 = vmatpush.msra.mxu0 %v199
    %253 = vmatpush.msra.mxu0 %v195
    %254 = vmatpush.msra.mxu0 %v191
    %255 = vmatpush.msra.mxu0 %v187
    %256 = vmatpush.msra.mxu0 %v183
    %257 = vmatpush.msra.mxu0 %v179
    %258 = vmatpush.msra.mxu0 %v175
    %259 = vmatpush.msra.mxu0 %v171
    %260 = vmatpush.msra.mxu0 %v167
    %261 = vmatpush.msra.mxu0 %v163
    %262 = vmatpush.msra.mxu0 %v159
    %263 = vmatpush.msra.mxu0 %v155
    %264 = vmatpush.msra.mxu0 %v151
    %265 = vmatpush.msra.mxu0 %v147
    %266 = vmatpush.msra.mxu0 %v143
    %267 = vmatmul.f32.gmra.mxu0 %v139
    %v268 = vpop.f32.mrf.mxu0
    %v269 = vadd.f32 0.0, %v268
    %270 = vmatmul.f32.gmra.mxu0 %v140
    %v271 = vpop.f32.mrf.mxu0
    %v272 = vadd.f32 0.0, %v271
    %273 = vdwg.mxu0
    %274 = vmatpush.msra.mxu0 %v204
    %275 = vmatpush.msra.mxu0 %v200
    %276 = vmatpush.msra.mxu0 %v196
    %277 = vmatpush.msra.mxu0 %v192
    %278 = vmatpush.msra.mxu0 %v188
    %279 = vmatpush.msra.mxu0 %v184
    %280 = vmatpush.msra.mxu0 %v180
    %281 = vmatpush.msra.mxu0 %v176
    %282 = vmatpush.msra.mxu0 %v172
    %283 = vmatpush.msra.mxu0 %v168
    %284 = vmatpush.msra.mxu0 %v164
    %285 = vmatpush.msra.mxu0 %v160
    %286 = vmatpush.msra.mxu0 %v156
    %287 = vmatpush.msra.mxu0 %v152
    %288 = vmatpush.msra.mxu0 %v148
    %289 = vmatpush.msra.mxu0 %v144
    %290 = vmatmul.f32.gmra.mxu0 %v139
    %v291 = vpop.f32.mrf.mxu0
    %v292 = vadd.f32 0.0, %v291
    %293 = vmatmul.f32.gmra.mxu0 %v140
    %v294 = vpop.f32.mrf.mxu0
    %v295 = vadd.f32 0.0, %v294
    %296 = vdwg.mxu0
    %vm297 = vcmask 523264
    %v299 = vsel %vm297, %v105, 0
    %v302 = vsel %vm297, %v106, 0
    %304 = vmatpush.msra.mxu0 0.0
    %305 = vmatpush.msra.mxu0 0.0
    %306 = vmatpush.msra.mxu0 0.0
    %307 = vmatpush.msra.mxu0 0.0
    %308 = vmatpush.msra.mxu0 0.0
    %309 = vmatpush.msra.mxu0 0.0
    %310 = vmatpush.msra.mxu0 0.0
    %311 = vmatpush.msra.mxu0 0.0
    %312 = vmatpush.msra.mxu0 %v135
    %313 = vmatpush.msra.mxu0 %v131
    %314 = vmatpush.msra.mxu0 %v127
    %315 = vmatpush.msra.mxu0 %v123
    %316 = vmatpush.msra.mxu0 %v119
    %317 = vmatpush.msra.mxu0 %v115
    %318 = vmatpush.msra.mxu0 %v111
    %319 = vmatpush.msra.mxu0 %v107
    %320 = vmatmul.f32.gmra.mxu0 %v299
    %v321 = vpop.f32.mrf.mxu0
    %v322 = vadd.f32 %v223, %v321
    %323 = vmatmul.f32.gmra.mxu0 %v302
    %v324 = vpop.f32.mrf.mxu0
    %v325 = vadd.f32 %v226, %v324
    %326 = vdwg.mxu0
    %327 = vmatpush.msra.mxu0 0.0
    %328 = vmatpush.msra.mxu0 0.0
    %329 = vmatpush.msra.mxu0 0.0
    %330 = vmatpush.msra.mxu0 0.0
    %331 = vmatpush.msra.mxu0 0.0
    %332 = vmatpush.msra.mxu0 0.0
    %333 = vmatpush.msra.mxu0 0.0
    %334 = vmatpush.msra.mxu0 0.0
    %335 = vmatpush.msra.mxu0 %v136
    %336 = vmatpush.msra.mxu0 %v132
    %337 = vmatpush.msra.mxu0 %v128
    %338 = vmatpush.msra.mxu0 %v124
    %339 = vmatpush.msra.mxu0 %v120
    %340 = vmatpush.msra.mxu0 %v116
    %341 = vmatpush.msra.mxu0 %v112
    %342 = vmatpush.msra.mxu0 %v108
    %343 = vmatmul.f32.gmra.mxu0 %v299
    %v344 = vpop.f32.mrf.mxu0
    %v345 = vadd.f32 %v246, %v344
    %346 = vmatmul.f32.gmra.mxu0 %v302
    %v347 = vpop.f32.mrf.mxu0
    %v348 = vadd.f32 %v249, %v347
    %349 = vdwg.mxu0
    %350 = vmatpush.msra.mxu0 0.0
    %351 = vmatpush.msra.mxu0 0.0
    %352 = vmatpush.msra.mxu0 0.0
    %353 = vmatpush.msra.mxu0 0.0
    %354 = vmatpush.msra.mxu0 0.0
    %355 = vmatpush.msra.mxu0 0.0
    %356 = vmatpush.msra.mxu0 0.0
    %357 = vmatpush.msra.mxu0 0.0
    %358 = vmatpush.msra.mxu0 %v137
    %359 = vmatpush.msra.mxu0 %v133
    %360 = vmatpush.msra.mxu0 %v129
    %361 = vmatpush.msra.mxu0 %v125
    %362 = vmatpush.msra.mxu0 %v121
    %363 = vmatpush.msra.mxu0 %v117
    %364 = vmatpush.msra.mxu0 %v113
    %365 = vmatpush.msra.mxu0 %v109
    %366 = vmatmul.f32.gmra.mxu0 %v299
    %v367 = vpop.f32.mrf.mxu0
    %v368 = vadd.f32 %v269, %v367
    %369 = vmatmul.f32.gmra.mxu0 %v302
    %v370 = vpop.f32.mrf.mxu0
    %v371 = vadd.f32 %v272, %v370
    %372 = vdwg.mxu0
    %373 = vmatpush.msra.mxu0 0.0
    %374 = vmatpush.msra.mxu0 0.0
    %375 = vmatpush.msra.mxu0 0.0
    %376 = vmatpush.msra.mxu0 0.0
    %377 = vmatpush.msra.mxu0 0.0
    %378 = vmatpush.msra.mxu0 0.0
    %379 = vmatpush.msra.mxu0 0.0
    %380 = vmatpush.msra.mxu0 0.0
    %381 = vmatpush.msra.mxu0 %v138
    %382 = vmatpush.msra.mxu0 %v134
    %383 = vmatpush.msra.mxu0 %v130
    %384 = vmatpush.msra.mxu0 %v126
    %385 = vmatpush.msra.mxu0 %v122
    %386 = vmatpush.msra.mxu0 %v118
    %387 = vmatpush.msra.mxu0 %v114
    %388 = vmatpush.msra.mxu0 %v110
    %389 = vmatmul.f32.gmra.mxu0 %v299
    %v390 = vpop.f32.mrf.mxu0
    %v391 = vadd.f32 %v292, %v390
    %392 = vmatmul.f32.gmra.mxu0 %v302
    %v393 = vpop.f32.mrf.mxu0
    %v394 = vadd.f32 %v295, %v393
    %395 = vdwg.mxu0
    %v396 = vld [vmem:[%s5] sm:$0xf]
    %v398 = vperm.slane %v396, 0
    %v399 = vperm.slane %v396, 1
    %v400 = vperm.slane %v396, 2
    %v401 = vperm.slane %v396, 3
    %v406 = vadd.f32 %v322, %v398
    %v407 = vadd.f32 %v345, %v399
    %v408 = vadd.f32 %v368, %v400
    %v409 = vadd.f32 %v391, %v401
    %v410 = vadd.f32 %v325, %v398
    %v411 = vadd.f32 %v348, %v399
    %v412 = vadd.f32 %v371, %v400
    %v413 = vadd.f32 %v394, %v401
    %v414 = vxor.u32 %v406, 2147483648
    %v415 = vxor.u32 %v407, 2147483648
    %v416 = vxor.u32 %v408, 2147483648
    %v417 = vxor.u32 %v410, 2147483648
    %v418 = vxor.u32 %v411, 2147483648
    %v419 = vxor.u32 %v412, 2147483648
    %v420 = vmul.f32 %v414, 1.442695
    %v421 = vpow.pop %v420
    %v422 = vmul.f32 %v415, 1.442695
    %v423 = vpow.pop %v422
    %v424 = vmul.f32 %v416, 1.442695
    %v425 = vpow.pop %v424
    %v426 = vmul.f32 %v417, 1.442695
    %v427 = vpow.pop %v426
    %v428 = vmul.f32 %v418, 1.442695
    %v429 = vpow.pop %v428
    %v430 = vmul.f32 %v419, 1.442695
    %v431 = vpow.pop %v430
    %v432 = vadd.f32 %v421, 1.0
    %v433 = vadd.f32 %v423, 1.0
    %v434 = vadd.f32 %v425, 1.0
    %v435 = vadd.f32 %v427, 1.0
    %v436 = vadd.f32 %v429, 1.0
    %v437 = vadd.f32 %v431, 1.0
    %v438 = vrcp.pop %v432
    %v439 = vmul.f32 %v432, %v438
    %v440 = vsub.f32 1.0, %v439
    %v441 = vmul.f32 %v438, %v440
    %v442 = vadd.f32 %v438, %v441
    %vm443 = vweird.f32 %v432
    %vm444 = vweird.f32 %v438
    %vm445 = vmor %vm443, %vm444
    %v446 = vsel %vm445, %v438, %v442
    %v447 = vand.u32 2147483647, %v432
    %vm448 = vcmp.eq.f32.partialorder %v447, 8.507059e+37
    %v449 = vand.u32 %v432, 2147483648
    %v450 = vor.u32 1.1754944e-38, %v449
    %v451 = vsel %vm448, %v450, %v446
    %v452 = vmul.f32 1.0, %v451
    %v453 = vrcp.pop %v433
    %v454 = vmul.f32 %v433, %v453
    %v455 = vsub.f32 1.0, %v454
    %v456 = vmul.f32 %v453, %v455
    %v457 = vadd.f32 %v453, %v456
    %vm458 = vweird.f32 %v433
    %vm459 = vweird.f32 %v453
    %vm460 = vmor %vm458, %vm459
    %v461 = vsel %vm460, %v453, %v457
    %v462 = vand.u32 2147483647, %v433
    %vm463 = vcmp.eq.f32.partialorder %v462, 8.507059e+37
    %v464 = vand.u32 %v433, 2147483648
    %v465 = vor.u32 1.1754944e-38, %v464
    %v466 = vsel %vm463, %v465, %v461
    %v467 = vmul.f32 1.0, %v466
    %v468 = vrcp.pop %v434
    %v469 = vmul.f32 %v434, %v468
    %v470 = vsub.f32 1.0, %v469
    %v471 = vmul.f32 %v468, %v470
    %v472 = vadd.f32 %v468, %v471
    %vm473 = vweird.f32 %v434
    %vm474 = vweird.f32 %v468
    %vm475 = vmor %vm473, %vm474
    %v476 = vsel %vm475, %v468, %v472
    %v477 = vand.u32 2147483647, %v434
    %vm478 = vcmp.eq.f32.partialorder %v477, 8.507059e+37
    %v479 = vand.u32 %v434, 2147483648
    %v480 = vor.u32 1.1754944e-38, %v479
    %v481 = vsel %vm478, %v480, %v476
    %v482 = vmul.f32 1.0, %v481
    %v483 = vrcp.pop %v435
    %v484 = vmul.f32 %v435, %v483
    %v485 = vsub.f32 1.0, %v484
    %v486 = vmul.f32 %v483, %v485
    %v487 = vadd.f32 %v483, %v486
    %vm488 = vweird.f32 %v435
    %vm489 = vweird.f32 %v483
    %vm490 = vmor %vm488, %vm489
    %v491 = vsel %vm490, %v483, %v487
    %v492 = vand.u32 2147483647, %v435
    %vm493 = vcmp.eq.f32.partialorder %v492, 8.507059e+37
    %v494 = vand.u32 %v435, 2147483648
    %v495 = vor.u32 1.1754944e-38, %v494
    %v496 = vsel %vm493, %v495, %v491
    %v497 = vmul.f32 1.0, %v496
    %v498 = vrcp.pop %v436
    %v499 = vmul.f32 %v436, %v498
    %v500 = vsub.f32 1.0, %v499
    %v501 = vmul.f32 %v498, %v500
    %v502 = vadd.f32 %v498, %v501
    %vm503 = vweird.f32 %v436
    %vm504 = vweird.f32 %v498
    %vm505 = vmor %vm503, %vm504
    %v506 = vsel %vm505, %v498, %v502
    %v507 = vand.u32 2147483647, %v436
    %vm508 = vcmp.eq.f32.partialorder %v507, 8.507059e+37
    %v509 = vand.u32 %v436, 2147483648
    %v510 = vor.u32 1.1754944e-38, %v509
    %v511 = vsel %vm508, %v510, %v506
    %v512 = vmul.f32 1.0, %v511
    %v513 = vrcp.pop %v437
    %v514 = vmul.f32 %v437, %v513
    %v515 = vsub.f32 1.0, %v514
    %v516 = vmul.f32 %v513, %v515
    %v517 = vadd.f32 %v513, %v516
    %vm518 = vweird.f32 %v437
    %vm519 = vweird.f32 %v513
    %vm520 = vmor %vm518, %vm519
    %v521 = vsel %vm520, %v513, %v517
    %v522 = vand.u32 2147483647, %v437
    %vm523 = vcmp.eq.f32.partialorder %v522, 8.507059e+37
    %v524 = vand.u32 %v437, 2147483648
    %v525 = vor.u32 1.1754944e-38, %v524
    %v526 = vsel %vm523, %v525, %v521
    %v527 = vmul.f32 1.0, %v526
    %v528 = vtanh.pop %v409
    %v529 = vtanh.pop %v413
    %v530 = vld [vmem:[#allocation7] sm:$0xff]
    %v531 = vld [vmem:[#allocation7 + $0x8] sm:$0xff]
    %v532 = vmul.f32 %v467, %v530
    %v533 = vmul.f32 %v512, %v531
    %v534 = vmul.f32 %v452, %v528
    %v535 = vmul.f32 %v497, %v529
    %v536 = vadd.f32 %v532, %v534
    %v537 = vadd.f32 %v533, %v535
    %v538 = vtanh.pop %v536
    %v539 = vtanh.pop %v537
    %v540 = vmul.f32 %v482, %v538
    %v541 = vmul.f32 %v527, %v539
    %542 = vst [vmem:[#allocation11] sm:$0xff] %v540
    %543 = vst [vmem:[#allocation11 + $0x8] sm:$0xff] %v541
    %544 = vst [vmem:[#allocation12] sm:$0xff] %v536
    %545 = vst [vmem:[#allocation12 + $0x8] sm:$0xff] %v537
    // Predicated region
    $region46: #{tpu_custom_call.1} parent=1 // pred_check
      _
    $region47: #{tpu_custom_call.1} parent=1 // pred_check_branch
      %547 = sbr.rel (0) target = $region49
    $region48: #{tpu_custom_call.1} parent=1 // pred_region
      %549 = vsyncadd [#allocation4], 0
      %s550 = sshll.u32 [#allocation11], 4
      %s551 = int_to_ptr.vmem [resolvable:$true] %s550
      %s552 = sshll.u32 %s6, 4
      %s553 = int_to_ptr.hbm [resolvable:$true] %s552
      %558 = dma.vmem_to_hbm [thread:$0]  %s551, 256, %s553, [#allocation4], 128, 128, 8
    $region49: #{tpu_custom_call.1} parent=1 // pred_fallthru
      _
    // Predicated region
    $region50: #{tpu_custom_call.1} parent=1 // pred_check
      _
    $region51: #{tpu_custom_call.1} parent=1 // pred_check_branch
      %560 = sbr.rel (0) target = $region53
    $region52: #{tpu_custom_call.1} parent=1 // pred_region
      %562 = vsyncadd [#allocation13], 0
      %s563 = sshll.u32 [#allocation12], 4
      %s564 = int_to_ptr.vmem [resolvable:$true] %s563
      %s565 = sshll.u32 %s7, 4
      %s566 = int_to_ptr.hbm [resolvable:$true] %s565
      %571 = dma.vmem_to_hbm [thread:$0]  %s564, 256, %s566, [#allocation13], 128, 128, 8
    $region53: #{tpu_custom_call.1} parent=1 // pred_fallthru
      _
    // Predicated region
    $region54: #{tpu_custom_call.1} parent=1 // pred_check
      _
    $region55: #{tpu_custom_call.1} parent=1 // pred_check_branch
      %573 = sbr.rel (0) target = $region57
    $region56: #{tpu_custom_call.1} parent=1 // pred_region
      %575 = dma.done [#allocation4], 256
    $region57: #{tpu_custom_call.1} parent=1 // pred_fallthru
      _
    // Predicated region
    $region58: #{tpu_custom_call.1} parent=1 // pred_check
      _
    $region59: #{tpu_custom_call.1} parent=1 // pred_check_branch
      %577 = sbr.rel (0) target = $region61
    $region60: #{tpu_custom_call.1} parent=1 // pred_region
      %579 = dma.done [#allocation13], 256
    $region61: #{tpu_custom_call.1} parent=1 // pred_fallthru
      _
    %580 = vsyncpa [#allocation3], 1
    %581 = vsyncpa [#allocation6], 1
    %582 = vsyncpa [#allocation9], 1
    %583 = vsyncpa [#allocation4], 1
    %584 = vsyncpa [#allocation13], 1

</llo_original>
